<compile_context>
chip_gen: v7x
topology: tpu7x:2x2x1
jax: 0.10.0
libtpu: 0.0.40
codegen_flags: <defaults>
</compile_context>

<pallas_src>
import jax
import jax.numpy as jnp
from jax.experimental import pallas as pl
from jax.experimental.pallas import tpu as pltpu

NINPUTS = 128
NHIDDEN = 32   # layers = [32]
NCLASSES = 2


def nn_fc_kernel(x_ref, w1_ref, b1_ref, w2_ref, b2_ref, o_ref):
    # Layer 1: (tb, 128) @ (128, 32) + (1, 32)   -- MXU, f32 accumulation.
    h = jnp.dot(x_ref[...], w1_ref[...],
                preferred_element_type=jnp.float32) + b1_ref[...]
    # Layer 2: (tb, 32) @ (32, 2) + (1, 2); trailing ReLU (no ReLU between the
    # two Linears in the reference module with default nlayers=1).
    y = jnp.dot(h, w2_ref[...],
                preferred_element_type=jnp.float32) + b2_ref[...]
    o_ref[...] = jnp.maximum(y, 0.0).astype(o_ref.dtype)


def nn_fc_forward(x, w1, b1, w2, b2, *, tb=None):
    """x: (B, NINPUTS) f32.
    w1: (NINPUTS, NHIDDEN), w2: (NHIDDEN, NCLASSES)  (already (in, out)).
    b1: (1, NHIDDEN), b2: (1, NCLASSES)."""
    B, D = x.shape
    assert D == NINPUTS
    H = w1.shape[1]
    C = w2.shape[1]

    # Large batch tiles: one grid step for small B, 4096-row tiles for big B
    # (x tile = 2 MB, double-buffered = 4 MB -> well within VMEM).
    if tb is None:
        tb = B if B <= 4096 else 4096
    tb = min(tb, B)
    grid = (pl.cdiv(B, tb),)

    return pl.pallas_call(
        nn_fc_kernel,
        out_shape=jax.ShapeDtypeStruct((B, C), jnp.float32),
        grid=grid,
        in_specs=[
            pl.BlockSpec((tb, D), lambda i: (i, 0)),   # x tile (streams over batch)
            pl.BlockSpec((D, H), lambda i: (0, 0)),    # W1 (resident in VMEM)
            pl.BlockSpec((1, H), lambda i: (0, 0)),    # b1 (resident)
            pl.BlockSpec((H, C), lambda i: (0, 0)),    # W2 (resident)
            pl.BlockSpec((1, C), lambda i: (0, 0)),    # b2 (resident)
        ],
        # Keep the output lane-sparse (C=2); padding to 128 lanes would roughly
        # double HBM traffic for a kernel bound by reading x.
        out_specs=pl.BlockSpec((tb, C), lambda i: (i, 0)),
        compiler_params=pltpu.CompilerParams(
            dimension_semantics=("parallel",)),
    )(x, w1, b1, w2, b2)


def init_params(key):
    """Deterministic init mimicking nn.Linear default (uniform +/- 1/sqrt(fan_in)).
    PyTorch stores weight as (out, in); we keep that convention here and
    transpose in the wrapper glue."""
    k1, k2, k3, k4 = jax.random.split(key, 4)
    bound1 = 1.0 / jnp.sqrt(NINPUTS)
    bound2 = 1.0 / jnp.sqrt(NHIDDEN)
    w1_t = jax.random.uniform(k1, (NHIDDEN, NINPUTS), jnp.float32, -bound1, bound1)
    b1 = jax.random.uniform(k2, (NHIDDEN,), jnp.float32, -bound1, bound1)
    w2_t = jax.random.uniform(k3, (NCLASSES, NHIDDEN), jnp.float32, -bound2, bound2)
    b2 = jax.random.uniform(k4, (NCLASSES,), jnp.float32, -bound2, bound2)
    return w1_t, b1, w2_t, b2


def _reference(x, w1, b1_row, w2, b2_row):
    # Pure-JAX reference of the exact (unfused) PyTorch forward semantics.
    return jnp.maximum((x @ w1 + b1_row) @ w2 + b2_row, 0.0)


if __name__ == "__main__":
    key = jax.random.PRNGKey(0)
    kx, kp = jax.random.split(key)

    w1_t, b1, w2_t, b2 = init_params(kp)
    # Glue: transpose weights to (in, out), reshape biases to (1, out).
    w1 = w1_t.T
    w2 = w2_t.T
    b1_row = b1.reshape(1, NHIDDEN)
    b2_row = b2.reshape(1, NCLASSES)

    # Small demo batch: single grid step (tb = B).
    B = 16
    x = jax.random.normal(kx, (B, NINPUTS), jnp.float32)
    out = jax.block_until_ready(nn_fc_forward(x, w1, b1_row, w2, b2_row))
    ref = _reference(x, w1, b1_row, w2, b2_row)
    assert out.shape == (B, NCLASSES)
    assert jnp.allclose(out, ref, atol=1e-5, rtol=1e-5)

    # Exercise the multi-step grid + masked tail block path (B not a multiple
    # of tb) to validate the pl.cdiv-based tiling.
    B2 = 40
    x2 = jax.random.normal(jax.random.PRNGKey(1), (B2, NINPUTS), jnp.float32)
    out2 = jax.block_until_ready(nn_fc_forward(x2, w1, b1_row, w2, b2_row, tb=16))
    ref2 = _reference(x2, w1, b1_row, w2, b2_row)
    assert out2.shape == (B2, NCLASSES)
    assert jnp.allclose(out2, ref2, atol=1e-5, rtol=1e-5)

    print("KERNEL_OK")
</pallas_src>

<mosaic_0001>
module attributes {stable_mosaic.version = 11 : i64} {
  func.func @nn_fc_kernel(%arg0: i32, %arg1: memref<16x128xf32, #tpu.memory_space<vmem>>, %arg2: memref<128x32xf32, #tpu.memory_space<vmem>>, %arg3: memref<1x32xf32, #tpu.memory_space<vmem>>, %arg4: memref<32x2xf32, #tpu.memory_space<vmem>>, %arg5: memref<1x2xf32, #tpu.memory_space<vmem>>, %arg6: memref<16x2xf32, #tpu.memory_space<vmem>>) attributes {dimension_semantics = [#tpu.dimension_semantics<parallel>], iteration_bounds = array<i64: 1>, scalar_prefetch = 0 : i64, scratch_operands = 0 : i64, tpu.core_type = #tpu.core_type<tc>, window_params = [{transform_indices = @transform_0, window_bounds = array<i64: 16, 128>}, {pipeline_mode = #tpu.pipeline_mode<synchronous>, transform_indices = @transform_1, window_bounds = array<i64: 128, 32>}, {pipeline_mode = #tpu.pipeline_mode<synchronous>, transform_indices = @transform_2, window_bounds = array<i64: 1, 32>}, {pipeline_mode = #tpu.pipeline_mode<synchronous>, transform_indices = @transform_3, window_bounds = array<i64: 32, 2>}, {pipeline_mode = #tpu.pipeline_mode<synchronous>, transform_indices = @transform_4, window_bounds = array<i64: 1, 2>}, {transform_indices = @transform_5, window_bounds = array<i64: 16, 2>}]} {
    %c0 = arith.constant 0 : index
    %c0_0 = arith.constant 0 : index
    %0 = vector.load %arg1[%c0, %c0_0] : memref<16x128xf32, #tpu.memory_space<vmem>>, vector<16x128xf32>
    %c0_1 = arith.constant 0 : index
    %c0_2 = arith.constant 0 : index
    %1 = vector.load %arg2[%c0_1, %c0_2] : memref<128x32xf32, #tpu.memory_space<vmem>>, vector<128x32xf32>
    %cst = arith.constant dense<0.000000e+00> : vector<16x32xf32>
    %2 = tpu.matmul %0, %1, %cst {dimension_numbers = #tpu.dot_dimension_numbers<[1], [0], [0], [1], [0, 0, 1, 1], [], []>} : vector<16x128xf32>, vector<128x32xf32>, vector<16x32xf32> -> vector<16x32xf32>
    %c0_3 = arith.constant 0 : index
    %c0_4 = arith.constant 0 : index
    %3 = vector.load %arg3[%c0_3, %c0_4] : memref<1x32xf32, #tpu.memory_space<vmem>>, vector<1x32xf32>
    %4 = vector.broadcast %3 : vector<1x32xf32> to vector<16x32xf32>
    %5 = arith.addf %2, %4 : vector<16x32xf32>
    %c0_5 = arith.constant 0 : index
    %c0_6 = arith.constant 0 : index
    %6 = vector.load %arg4[%c0_5, %c0_6] : memref<32x2xf32, #tpu.memory_space<vmem>>, vector<32x2xf32>
    %cst_7 = arith.constant dense<0.000000e+00> : vector<16x2xf32>
    %7 = tpu.matmul %5, %6, %cst_7 {dimension_numbers = #tpu.dot_dimension_numbers<[1], [0], [0], [1], [0, 0, 1, 1], [], []>} : vector<16x32xf32>, vector<32x2xf32>, vector<16x2xf32> -> vector<16x2xf32>
    %c0_8 = arith.constant 0 : index
    %c0_9 = arith.constant 0 : index
    %8 = vector.load %arg5[%c0_8, %c0_9] : memref<1x2xf32, #tpu.memory_space<vmem>>, vector<1x2xf32>
    %9 = vector.broadcast %8 : vector<1x2xf32> to vector<16x2xf32>
    %10 = arith.addf %7, %9 : vector<16x2xf32>
    %cst_10 = arith.constant 0.000000e+00 : f32
    %11 = vector.broadcast %cst_10 : f32 to vector<16x2xf32>
    %12 = arith.maximumf %10, %11 : vector<16x2xf32>
    %c0_11 = arith.constant 0 : index
    %c0_12 = arith.constant 0 : index
    %13 = vector.load %arg6[%c0_11, %c0_12] : memref<16x2xf32, #tpu.memory_space<vmem>>, vector<16x2xf32>
    tpu.vector_store %arg6[%c0_11, %c0_12], %12 {strides = array<i32>} : memref<16x2xf32, #tpu.memory_space<vmem>>, vector<16x2xf32>,
    return
  }
  func.func @transform_0(%arg0: i32) -> (i32, i32) {
    %c0_i32 = arith.constant 0 : i32
    %c0_i32_0 = arith.constant 0 : i32
    return %arg0, %c0_i32 : i32, i32
  }
  func.func @transform_1(%arg0: i32) -> (i32, i32) {
    %c0_i32 = arith.constant 0 : i32
    %c0_i32_0 = arith.constant 0 : i32
    %c0_i32_1 = arith.constant 0 : i32
    return %c0_i32, %c0_i32_0 : i32, i32
  }
  func.func @transform_2(%arg0: i32) -> (i32, i32) {
    %c0_i32 = arith.constant 0 : i32
    %c0_i32_0 = arith.constant 0 : i32
    %c0_i32_1 = arith.constant 0 : i32
    return %c0_i32, %c0_i32_0 : i32, i32
  }
  func.func @transform_3(%arg0: i32) -> (i32, i32) {
    %c0_i32 = arith.constant 0 : i32
    %c0_i32_0 = arith.constant 0 : i32
    %c0_i32_1 = arith.constant 0 : i32
    return %c0_i32, %c0_i32_0 : i32, i32
  }
  func.func @transform_4(%arg0: i32) -> (i32, i32) {
    %c0_i32 = arith.constant 0 : i32
    %c0_i32_0 = arith.constant 0 : i32
    %c0_i32_1 = arith.constant 0 : i32
    return %c0_i32, %c0_i32_0 : i32, i32
  }
  func.func @transform_5(%arg0: i32) -> (i32, i32) {
    %c0_i32 = arith.constant 0 : i32
    %c0_i32_0 = arith.constant 0 : i32
    return %arg0, %c0_i32 : i32, i32
  }
}

</mosaic_0001>

<llo_original>
// kernel: tpu_custom_call.1
$region0: #{tpu_custom_call.1}
  #allocation0 [shape = 'u32[]', space=smem, size = 0x4, offset = 0x4, fixed_abs, tag = 'smem constant byte address 0x4 - core index']
  #allocation1 [shape = 'u32[144,128]{1,0:T(1,128)}', space=vmem, size = 0x12000, scoped, tag = 'internal scratch']
  %s0 = inlined_call_operand.vmem [shape: f32[16,128], index: 0, kind: input, shape index: {}]
  %s1 = inlined_call_operand.vmem [shape: f32[128,32], index: 1, kind: input, shape index: {}]
  %s2 = inlined_call_operand.vmem [shape: f32[1,32], index: 2, kind: input, shape index: {}]
  %s3 = inlined_call_operand.vmem [shape: f32[32,2], index: 3, kind: input, shape index: {}]
  %s4 = inlined_call_operand.vmem [shape: f32[1,2], index: 4, kind: input, shape index: {}]
  %s5 = inlined_call_operand.vmem [shape: f32[16,2], index: 5, kind: output, shape index: {}]
  %s6 = sld [smem:[#allocation0]]
  $region30: #{tpu_custom_call.1} parent=0
    _
  %s8 = ssub.s32 1, %s6
  %s9 = scalar_select 0, %s8, %s6
  // Predicated region
  $region2: #{tpu_custom_call.1} parent=0 // pred_check
    _
  $region3: #{tpu_custom_call.1} parent=0 // pred_check_branch
    %11 = sbr.rel (0) target = $region5
  $region4: #{tpu_custom_call.1} parent=0 // pred_region
    _
  $region5: #{tpu_custom_call.1} parent=0 // pred_fallthru
    _
  // Predicated region
  $region6: #{tpu_custom_call.1} parent=0 // pred_check
    _
  $region7: #{tpu_custom_call.1} parent=0 // pred_check_branch
    %13 = sbr.rel (0) target = $region9
  $region8: #{tpu_custom_call.1} parent=0 // pred_region
    _
  $region9: #{tpu_custom_call.1} parent=0 // pred_fallthru
    _
  // Predicated region
  $region10: #{tpu_custom_call.1} parent=0 // pred_check
    _
  $region11: #{tpu_custom_call.1} parent=0 // pred_check_branch
    %15 = sbr.rel (0) target = $region13
  $region12: #{tpu_custom_call.1} parent=0 // pred_region
    _
  $region13: #{tpu_custom_call.1} parent=0 // pred_fallthru
    _
  // Predicated region
  $region14: #{tpu_custom_call.1} parent=0 // pred_check
    _
  $region15: #{tpu_custom_call.1} parent=0 // pred_check_branch
    %17 = sbr.rel (0) target = $region17
  $region16: #{tpu_custom_call.1} parent=0 // pred_region
    _
  $region17: #{tpu_custom_call.1} parent=0 // pred_fallthru
    _
  // Predicated region
  $region18: #{tpu_custom_call.1} parent=0 // pred_check
    _
  $region19: #{tpu_custom_call.1} parent=0 // pred_check_branch
    %19 = sbr.rel (0) target = $region21
  $region20: #{tpu_custom_call.1} parent=0 // pred_region
    _
  $region21: #{tpu_custom_call.1} parent=0 // pred_fallthru
    _
  %v20 = vld [vmem:[%s0] sm:$0xff]
  %v21 = vld [vmem:[%s0 + $0x8] sm:$0xff]
  %v22 = vld [vmem:[%s1] sm:$0xff]
  %v23 = vld [vmem:[%s1 + $0x8] sm:$0xff]
  %v24 = vld [vmem:[%s1 + $0x10] sm:$0xff]
  %v25 = vld [vmem:[%s1 + $0x18] sm:$0xff]
  %v26 = vld [vmem:[%s1 + $0x20] sm:$0xff]
  %v27 = vld [vmem:[%s1 + $0x28] sm:$0xff]
  %v28 = vld [vmem:[%s1 + $0x30] sm:$0xff]
  %v29 = vld [vmem:[%s1 + $0x38] sm:$0xff]
  %v30 = vld [vmem:[%s1 + $0x40] sm:$0xff]
  %v31 = vld [vmem:[%s1 + $0x48] sm:$0xff]
  %v32 = vld [vmem:[%s1 + $0x50] sm:$0xff]
  %v33 = vld [vmem:[%s1 + $0x58] sm:$0xff]
  %v34 = vld [vmem:[%s1 + $0x60] sm:$0xff]
  %v35 = vld [vmem:[%s1 + $0x68] sm:$0xff]
  %v36 = vld [vmem:[%s1 + $0x70] sm:$0xff]
  %v37 = vld [vmem:[%s1 + $0x78] sm:$0xff]
  %v38 = vld [vmem:[%s2] sm:$0x1]
  %v40 = vlaneseq
  %v41 = vshrl.u32 %v40, 7
  %v42 = vsub.s32 0, %v41
  %v43 = vrot.slane %v38, %v42
  %45 = vmatprep.subr.mxu0 0.0
  %46 = vmatpush1.msra.mxu0 %v22
  %47 = vmatprep.subr.mxu0 0.0
  %48 = vmatpush1.msra.mxu0 %v23
  %49 = vmatprep.subr.mxu0 0.0
  %50 = vmatpush1.msra.mxu0 %v24
  %51 = vmatprep.subr.mxu0 0.0
  %52 = vmatpush1.msra.mxu0 %v25
  %53 = vmatprep.subr.mxu0 0.0
  %54 = vmatpush1.msra.mxu0 %v26
  %55 = vmatprep.subr.mxu0 0.0
  %56 = vmatpush1.msra.mxu0 %v27
  %57 = vmatprep.subr.mxu0 0.0
  %58 = vmatpush1.msra.mxu0 %v28
  %59 = vmatprep.subr.mxu0 0.0
  %60 = vmatpush1.msra.mxu0 %v29
  %61 = vmatprep.subr.mxu0 0.0
  %62 = vmatpush1.msra.mxu0 %v30
  %63 = vmatprep.subr.mxu0 0.0
  %64 = vmatpush1.msra.mxu0 %v31
  %65 = vmatprep.subr.mxu0 0.0
  %66 = vmatpush1.msra.mxu0 %v32
  %67 = vmatprep.subr.mxu0 0.0
  %68 = vmatpush1.msra.mxu0 %v33
  %69 = vmatprep.subr.mxu0 0.0
  %70 = vmatpush1.msra.mxu0 %v34
  %71 = vmatprep.subr.mxu0 0.0
  %72 = vmatpush1.msra.mxu0 %v35
  %73 = vmatprep.subr.mxu0 0.0
  %74 = vmatpush1.msra.mxu0 %v36
  %75 = vmatprep.subr.mxu0 0.0
  %76 = vmatpush1.msra.mxu0 %v37
  %77 = vmatprep.subr.mxu0 0.0
  %78 = vmatpush1.msra.mxu0 0.0
  %79 = vmatprep.subr.mxu0 0.0
  %80 = vmatpush1.msra.mxu0 0.0
  %81 = vmatprep.subr.mxu0 0.0
  %82 = vmatpush1.msra.mxu0 0.0
  %83 = vmatprep.subr.mxu0 0.0
  %84 = vmatpush1.msra.mxu0 0.0
  %85 = vmatprep.subr.mxu0 0.0
  %86 = vmatpush1.msra.mxu0 0.0
  %87 = vmatprep.subr.mxu0 0.0
  %88 = vmatpush1.msra.mxu0 0.0
  %89 = vmatprep.subr.mxu0 0.0
  %90 = vmatpush1.msra.mxu0 0.0
  %91 = vmatprep.subr.mxu0 0.0
  %92 = vmatpush1.msra.mxu0 0.0
  %93 = vmatprep.subr.mxu0 0.0
  %94 = vmatpush1.msra.mxu0 0.0
  %95 = vmatprep.subr.mxu0 0.0
  %96 = vmatpush1.msra.mxu0 0.0
  %97 = vmatprep.subr.mxu0 0.0
  %98 = vmatpush1.msra.mxu0 0.0
  %99 = vmatprep.subr.mxu0 0.0
  %100 = vmatpush1.msra.mxu0 0.0
  %101 = vmatprep.subr.mxu0 0.0
  %102 = vmatpush1.msra.mxu0 0.0
  %103 = vmatprep.subr.mxu0 0.0
  %104 = vmatpush1.msra.mxu0 0.0
  %105 = vmatprep.subr.mxu0 0.0
  %106 = vmatpush1.msra.mxu0 0.0
  %107 = vmatprep.subr.mxu0 0.0
  %108 = vmatpush1.msra.mxu0 0.0
  %109 = vmatprep.mubr.f32.mxu0 0.0
  %110 = vmatmul.mubr.f32.gmra.mrb[0].mxu0 %v20
  %v111 = vpop.f32.mrb[0].mxu0
  %v112 = vadd.f32 %v43, %v111
  %v113 = vpop.f32.mrb[0].mxu0
  %114 = vmatprep.mubr.f32.mxu0 0.0
  %115 = vmatmul.mubr.f32.gmra.mrb[0].mxu0 %v21
  %v116 = vpop.f32.mrb[0].mxu0
  %v117 = vadd.f32 %v43, %v116
  %v118 = vpop.f32.mrb[0].mxu0
  %119 = vdwg.mxu0
  %v120 = vld [vmem:[%s3] sm:$0xff]
  %v121 = vld [vmem:[%s3 + $0x8] sm:$0xff]
  %v122 = vld [vmem:[%s3 + $0x10] sm:$0xff]
  %v123 = vld [vmem:[%s3 + $0x18] sm:$0xff]
  %v124 = vld [vmem:[%s4] sm:$0x1]
  %v126 = vlaneseq
  %v127 = vshrl.u32 %v126, 7
  %v128 = vsub.s32 0, %v127
  %v129 = vrot.slane %v124, %v128
  %vm131 = vcmask 261120
  %v133 = vsel %vm131, %v112, 0
  %v136 = vsel %vm131, %v117, 0
  %138 = vmatprep.subr.mxu0 0.0
  %139 = vmatpush1.msra.mxu0 %v120
  %140 = vmatprep.subr.mxu0 0.0
  %141 = vmatpush1.msra.mxu0 %v121
  %142 = vmatprep.subr.mxu0 0.0
  %143 = vmatpush1.msra.mxu0 %v122
  %144 = vmatprep.subr.mxu0 0.0
  %145 = vmatpush1.msra.mxu0 %v123
  %146 = vmatprep.subr.mxu0 0.0
  %147 = vmatpush1.msra.mxu0 0.0
  %148 = vmatprep.subr.mxu0 0.0
  %149 = vmatpush1.msra.mxu0 0.0
  %150 = vmatprep.subr.mxu0 0.0
  %151 = vmatpush1.msra.mxu0 0.0
  %152 = vmatprep.subr.mxu0 0.0
  %153 = vmatpush1.msra.mxu0 0.0
  %154 = vmatprep.subr.mxu0 0.0
  %155 = vmatpush1.msra.mxu0 0.0
  %156 = vmatprep.subr.mxu0 0.0
  %157 = vmatpush1.msra.mxu0 0.0
  %158 = vmatprep.subr.mxu0 0.0
  %159 = vmatpush1.msra.mxu0 0.0
  %160 = vmatprep.subr.mxu0 0.0
  %161 = vmatpush1.msra.mxu0 0.0
  %162 = vmatprep.subr.mxu0 0.0
  %163 = vmatpush1.msra.mxu0 0.0
  %164 = vmatprep.subr.mxu0 0.0
  %165 = vmatpush1.msra.mxu0 0.0
  %166 = vmatprep.subr.mxu0 0.0
  %167 = vmatpush1.msra.mxu0 0.0
  %168 = vmatprep.subr.mxu0 0.0
  %169 = vmatpush1.msra.mxu0 0.0
  %170 = vmatprep.subr.mxu0 0.0
  %171 = vmatpush1.msra.mxu0 0.0
  %172 = vmatprep.subr.mxu0 0.0
  %173 = vmatpush1.msra.mxu0 0.0
  %174 = vmatprep.subr.mxu0 0.0
  %175 = vmatpush1.msra.mxu0 0.0
  %176 = vmatprep.subr.mxu0 0.0
  %177 = vmatpush1.msra.mxu0 0.0
  %178 = vmatprep.subr.mxu0 0.0
  %179 = vmatpush1.msra.mxu0 0.0
  %180 = vmatprep.subr.mxu0 0.0
  %181 = vmatpush1.msra.mxu0 0.0
  %182 = vmatprep.subr.mxu0 0.0
  %183 = vmatpush1.msra.mxu0 0.0
  %184 = vmatprep.subr.mxu0 0.0
  %185 = vmatpush1.msra.mxu0 0.0
  %186 = vmatprep.subr.mxu0 0.0
  %187 = vmatpush1.msra.mxu0 0.0
  %188 = vmatprep.subr.mxu0 0.0
  %189 = vmatpush1.msra.mxu0 0.0
  %190 = vmatprep.subr.mxu0 0.0
  %191 = vmatpush1.msra.mxu0 0.0
  %192 = vmatprep.subr.mxu0 0.0
  %193 = vmatpush1.msra.mxu0 0.0
  %194 = vmatprep.subr.mxu0 0.0
  %195 = vmatpush1.msra.mxu0 0.0
  %196 = vmatprep.subr.mxu0 0.0
  %197 = vmatpush1.msra.mxu0 0.0
  %198 = vmatprep.subr.mxu0 0.0
  %199 = vmatpush1.msra.mxu0 0.0
  %200 = vmatprep.subr.mxu0 0.0
  %201 = vmatpush1.msra.mxu0 0.0
  %202 = vmatprep.mubr.f32.mxu0 0.0
  %203 = vmatmul.mubr.f32.gmra.mrb[0].mxu0 %v133
  %v204 = vpop.f32.mrb[0].mxu0
  %v205 = vadd.f32 %v129, %v204
  %v206 = vpop.f32.mrb[0].mxu0
  %207 = vmatprep.mubr.f32.mxu0 0.0
  %208 = vmatmul.mubr.f32.gmra.mrb[0].mxu0 %v136
  %v209 = vpop.f32.mrb[0].mxu0
  %v210 = vadd.f32 %v129, %v209
  %v211 = vpop.f32.mrb[0].mxu0
  %212 = vdwg.mxu0
  %v213 = vmax.f32 %v205, 0.0
  %v214 = vmax.f32 %v210, 0.0
  %vm215 = vcmask 15360
  %216 = vst.msk [vmem:[%s5] sm:$0xff] %vm215, %v213
  %217 = vst.msk [vmem:[%s5 + $0x8] sm:$0xff] %vm215, %v214
  // Predicated region
  $region22: #{tpu_custom_call.1} parent=0 // pred_check
    _
  $region23: #{tpu_custom_call.1} parent=0 // pred_check_branch
    %219 = sbr.rel (0) target = $region25
  $region24: #{tpu_custom_call.1} parent=0 // pred_region
    _
  $region25: #{tpu_custom_call.1} parent=0 // pred_fallthru
    _
  // Predicated region
  $region26: #{tpu_custom_call.1} parent=0 // pred_check
    _
  $region27: #{tpu_custom_call.1} parent=0 // pred_check_branch
    %221 = sbr.rel (0) target = $region29
  $region28: #{tpu_custom_call.1} parent=0 // pred_region
    _
  $region29: #{tpu_custom_call.1} parent=0 // pred_fallthru
    _

</llo_original>
